<compile_context>
chip_gen: v5e
topology: v5e:2x2
jax: 0.10.0
libtpu: 0.0.40
codegen_flags: <defaults>
</compile_context>

<pallas_src>
import functools

import numpy as np
import jax
import jax.numpy as jnp
from jax import lax
from jax.experimental import pallas as pl
from jax.experimental.pallas import tpu as pltpu


def _conv_block_kernel(x_ref, w1_ref, w2_ref, b_ref, m_ref, o_ref, *, H, W):
    """One batch chunk per grid step, channel-major flat-spatial layout.

    x_ref : (1, NC, HW)   chunk of images; (image, channel) on sublanes,
                          pixels on lanes (NC = chunk * C)
    w1_ref: (NC, 9*NC)    conv1 block-diagonal fused tap weights (BN1 folded)
    w2_ref: (NC, 9*NC)    conv2 fused tap weights (BN2 folded)
    b_ref : (2, NC, 1)    folded biases (conv bias + BN shift) for conv1/conv2
    m_ref : (9, 1, HW)    precomputed 0/1 halo masks per tap (t = ky*3 + kx)
    o_ref : (1, NC, HW)   output chunk (lane-dense last dim)
    """
    HW = H * W
    x = x_ref[0]  # (NC, HW) f32

    def conv3x3(inp, w):
        # Stack all 9 shifted+masked taps along the contraction dim, then hit
        # the MXU once: (NC, 9*NC) @ (9*NC, HW) -> (NC, HW).
        parts = []
        for ky in range(3):
            for kx in range(3):
                t = ky * 3 + kx
                d = (ky - 1) * W + (kx - 1)  # flat offset of this tap
                if d == 0:
                    parts.append(inp)        # center tap: mask is all ones
                else:
                    # shifted[p] = inp[p + d]; wrapped values are zeroed by
                    # the halo mask (rolls act per-row, so no cross-image mix)
                    shifted = pltpu.roll(inp, (-d) % HW, axis=1)
                    parts.append(shifted * m_ref[t])
        stacked = jnp.concatenate(parts, axis=0)  # (9*NC, HW)
        return jnp.dot(w, stacked, preferred_element_type=jnp.float32)

    y1 = conv3x3(x, w1_ref[...]) + b_ref[0]
    y2 = conv3x3(y1, w2_ref[...]) + b_ref[1]
    o_ref[0] = jnp.maximum(y2, 0.0)


def _pick_chunk(N, C):
    """Images per grid step: enough to fill >= 8 f32 sublanes, dividing N."""
    chunk = min(N, max(1, -(-8 // C)))  # ceil(8 / C), capped at N
    while N % chunk:
        chunk -= 1
    return chunk


def _block_diag_tap_weights(w_taps, chunk):
    """(9, Cout, Cin) tap weights -> (chunk*Cout, 9*chunk*Cin) block-diag."""
    nine, cout, cin = w_taps.shape
    eye = jnp.eye(chunk, dtype=w_taps.dtype)
    blk = jnp.einsum("nm,tij->tnimj", eye, w_taps)          # (9,ch,Co,ch,Ci)
    blk = blk.reshape(nine, chunk * cout, chunk * cin)
    return jnp.transpose(blk, (1, 0, 2)).reshape(chunk * cout,
                                                 nine * chunk * cin)


def _build_halo_masks(H, W):
    """(9, 1, H*W) float32 masks: zero where tap (dy, dx) reads out of image."""
    HW = H * W
    pos = np.arange(HW)
    row, col = pos // W, pos % W
    masks = np.ones((9, HW), np.float32)
    for ky in range(3):
        for kx in range(3):
            dy, dx = ky - 1, kx - 1
            m = np.ones(HW, bool)
            if dy > 0:
                m &= row < H - dy
            if dy < 0:
                m &= row >= -dy
            if dx > 0:
                m &= col < W - dx
            if dx < 0:
                m &= col >= -dx
            masks[ky * 3 + kx] = m.astype(np.float32)
    return jnp.asarray(masks.reshape(9, 1, HW))


@jax.jit
def type1_forward(x_nchw, w1_taps, bias1, w2_taps, bias2):
    """x_nchw: (N, C, H, W) f32. Weights in (9, Cout, Cin) tap layout with BN
    scale folded in; biases (C,) with BN shift folded in. Returns NCHW f32."""
    N, C, H, W = x_nchw.shape
    HW = H * W

    chunk = _pick_chunk(N, C)         # images folded into sublanes per step
    num_chunks = N // chunk
    NC = chunk * C

    x_flat = x_nchw.reshape(num_chunks, NC, HW)   # free contiguous reshape
    w1_f = _block_diag_tap_weights(w1_taps, chunk)          # (NC, 9*NC)
    w2_f = _block_diag_tap_weights(w2_taps, chunk)
    biases = jnp.stack([jnp.tile(bias1, chunk),
                        jnp.tile(bias2, chunk)], axis=0).reshape(2, NC, 1)
    masks = _build_halo_masks(H, W)                         # (9, 1, HW)

    kernel = functools.partial(_conv_block_kernel, H=H, W=W)

    out_flat = pl.pallas_call(
        kernel,
        out_shape=jax.ShapeDtypeStruct((num_chunks, NC, HW), jnp.float32),
        grid_spec=pltpu.PrefetchScalarGridSpec(
            num_scalar_prefetch=0,
            grid=(num_chunks,),
            in_specs=[
                pl.BlockSpec((1, NC, HW), lambda n: (n, 0, 0)),
                pl.BlockSpec((NC, 9 * NC), lambda n: (0, 0)),
                pl.BlockSpec((NC, 9 * NC), lambda n: (0, 0)),
                pl.BlockSpec((2, NC, 1), lambda n: (0, 0, 0)),
                pl.BlockSpec((9, 1, HW), lambda n: (0, 0, 0)),
            ],
            out_specs=pl.BlockSpec((1, NC, HW), lambda n: (n, 0, 0)),
        ),
        compiler_params=pltpu.CompilerParams(
            dimension_semantics=("parallel",)),
    )(x_flat, w1_f, w2_f, biases, masks)
    return out_flat.reshape(N, C, H, W)


def _fold_bn_into_conv(w, b, gamma, beta, mean, var, eps=1e-5):
    """Fold eval-mode BatchNorm into the conv.

    w: (Cout, Cin, 3, 3) PyTorch layout, b: (Cout,).
    Returns (w_taps, bias): w_taps (9, Cout, Cin) with BN scale folded in and
    bias (Cout,), such that conv(x, w_taps) + bias == BN(conv(x, w) + b).
    """
    cout, cin = w.shape[0], w.shape[1]
    scale = gamma / jnp.sqrt(var + eps)                    # (Cout,)
    w_eff = w * scale[:, None, None, None]                 # (Cout, Cin, 3, 3)
    bias = (b - mean) * scale + beta                       # (Cout,)
    w_taps = jnp.transpose(w_eff, (2, 3, 0, 1)).reshape(9, cout, cin)
    return w_taps, bias


def _reference(x, params1, params2, eps=1e-5):
    """Pure-JAX reference: NCHW conv2d(pad=1) + eval-mode BN, twice, ReLU."""
    def block(z, w, b, gamma, beta, mean, var):
        y = lax.conv_general_dilated(
            z, w, window_strides=(1, 1), padding="SAME",
            dimension_numbers=("NCHW", "OIHW", "NCHW"),
            precision=lax.Precision.HIGHEST)
        y = y + b[None, :, None, None]
        inv = 1.0 / jnp.sqrt(var + eps)
        return ((y - mean[None, :, None, None])
                * (gamma * inv)[None, :, None, None]
                + beta[None, :, None, None])

    y = block(x, *params1)
    y = block(y, *params2)
    return jnp.maximum(y, 0.0)


if __name__ == "__main__":
    # Module requires inp == out for the forward to be well-formed.
    N, C, H, W = 2, 4, 16, 16

    key = jax.random.PRNGKey(0)
    ks = jax.random.split(key, 13)

    # Input in PyTorch NCHW convention (kernel consumes NCHW natively).
    x = jax.random.normal(ks[0], (N, C, H, W), jnp.float32)

    # Conv weights in PyTorch (Cout, Cin, kH, kW) layout + biases.
    w1 = 0.2 * jax.random.normal(ks[1], (C, C, 3, 3), jnp.float32)
    b1 = 0.1 * jax.random.normal(ks[2], (C,), jnp.float32)
    w2 = 0.2 * jax.random.normal(ks[3], (C, C, 3, 3), jnp.float32)
    b2 = 0.1 * jax.random.normal(ks[4], (C,), jnp.float32)

    # BatchNorm (eval-mode) parameters / running stats.
    g1 = 1.0 + 0.05 * jax.random.normal(ks[5], (C,), jnp.float32)
    be1 = 0.05 * jax.random.normal(ks[6], (C,), jnp.float32)
    m1 = 0.1 * jax.random.normal(ks[7], (C,), jnp.float32)
    v1 = 1.0 + 0.1 * jax.random.uniform(ks[8], (C,), jnp.float32)
    g2 = 1.0 + 0.05 * jax.random.normal(ks[9], (C,), jnp.float32)
    be2 = 0.05 * jax.random.normal(ks[10], (C,), jnp.float32)
    m2 = 0.1 * jax.random.normal(ks[11], (C,), jnp.float32)
    v2 = 1.0 + 0.1 * jax.random.uniform(ks[12], (C,), jnp.float32)

    # Host-side folding: BN scale -> weights, conv bias + BN shift -> bias.
    w1t, b1e = _fold_bn_into_conv(w1, b1, g1, be1, m1, v1)
    w2t, b2e = _fold_bn_into_conv(w2, b2, g2, be2, m2, v2)

    out = type1_forward(x, w1t, b1e, w2t, b2e)
    out = jax.block_until_ready(out)

    ref = _reference(x, (w1, b1, g1, be1, m1, v1), (w2, b2, g2, be2, m2, v2))
    assert out.shape == (N, C, H, W)
    assert jnp.allclose(out, ref, atol=1e-4, rtol=1e-4), "mismatch vs reference"

    print("KERNEL_OK")
</pallas_src>

<mosaic_0001>
module attributes {stable_mosaic.version = 11 : i64} {
  func.func @_conv_block_kernel(%arg0: i32, %arg1: memref<1x8x256xf32, #tpu.memory_space<vmem>>, %arg2: memref<8x72xf32, #tpu.memory_space<vmem>>, %arg3: memref<8x72xf32, #tpu.memory_space<vmem>>, %arg4: memref<2x8x1xf32, #tpu.memory_space<vmem>>, %arg5: memref<9x1x256xf32, #tpu.memory_space<vmem>>, %arg6: memref<1x8x256xf32, #tpu.memory_space<vmem>>) attributes {dimension_semantics = [#tpu.dimension_semantics<parallel>], iteration_bounds = array<i64: 1>, scalar_prefetch = 0 : i64, scratch_operands = 0 : i64, tpu.core_type = #tpu.core_type<tc>, window_params = [{transform_indices = @transform_0, window_bounds = array<i64: 1, 8, 256>}, {pipeline_mode = #tpu.pipeline_mode<synchronous>, transform_indices = @transform_1, window_bounds = array<i64: 8, 72>}, {pipeline_mode = #tpu.pipeline_mode<synchronous>, transform_indices = @transform_2, window_bounds = array<i64: 8, 72>}, {pipeline_mode = #tpu.pipeline_mode<synchronous>, transform_indices = @transform_3, window_bounds = array<i64: 2, 8, 1>}, {pipeline_mode = #tpu.pipeline_mode<synchronous>, transform_indices = @transform_4, window_bounds = array<i64: 9, 1, 256>}, {transform_indices = @transform_5, window_bounds = array<i64: 1, 8, 256>}]} {
    %c0 = arith.constant 0 : index
    %c0_0 = arith.constant 0 : index
    %c0_1 = arith.constant 0 : index
    %0 = vector.load %arg1[%c0, %c0_0, %c0_1] : memref<1x8x256xf32, #tpu.memory_space<vmem>>, vector<1x8x256xf32>
    %1 = vector.shape_cast %0 : vector<1x8x256xf32> to vector<8x256xf32>
    %c0_2 = arith.constant 0 : index
    %c0_3 = arith.constant 0 : index
    %2 = vector.load %arg2[%c0_2, %c0_3] : memref<8x72xf32, #tpu.memory_space<vmem>>, vector<8x72xf32>
    %c17_i32 = arith.constant 17 : i32
    %3 = tpu.dynamic_rotate %1 by %c17_i32 dim 1 : vector<8x256xf32>, i32 -> vector<8x256xf32>
    %c0_4 = arith.constant 0 : index
    %c0_5 = arith.constant 0 : index
    %c0_6 = arith.constant 0 : index
    %4 = vector.load %arg5[%c0_4, %c0_5, %c0_6] : memref<9x1x256xf32, #tpu.memory_space<vmem>>, vector<1x1x256xf32>
    %5 = vector.shape_cast %4 : vector<1x1x256xf32> to vector<1x256xf32>
    %6 = vector.broadcast %5 : vector<1x256xf32> to vector<8x256xf32>
    %7 = arith.mulf %3, %6 : vector<8x256xf32>
    %c16_i32 = arith.constant 16 : i32
    %8 = tpu.dynamic_rotate %1 by %c16_i32 dim 1 : vector<8x256xf32>, i32 -> vector<8x256xf32>
    %c1 = arith.constant 1 : index
    %c0_7 = arith.constant 0 : index
    %c0_8 = arith.constant 0 : index
    %9 = vector.load %arg5[%c1, %c0_7, %c0_8] : memref<9x1x256xf32, #tpu.memory_space<vmem>>, vector<1x1x256xf32>
    %10 = vector.shape_cast %9 : vector<1x1x256xf32> to vector<1x256xf32>
    %11 = vector.broadcast %10 : vector<1x256xf32> to vector<8x256xf32>
    %12 = arith.mulf %8, %11 : vector<8x256xf32>
    %c15_i32 = arith.constant 15 : i32
    %13 = tpu.dynamic_rotate %1 by %c15_i32 dim 1 : vector<8x256xf32>, i32 -> vector<8x256xf32>
    %c2 = arith.constant 2 : index
    %c0_9 = arith.constant 0 : index
    %c0_10 = arith.constant 0 : index
    %14 = vector.load %arg5[%c2, %c0_9, %c0_10] : memref<9x1x256xf32, #tpu.memory_space<vmem>>, vector<1x1x256xf32>
    %15 = vector.shape_cast %14 : vector<1x1x256xf32> to vector<1x256xf32>
    %16 = vector.broadcast %15 : vector<1x256xf32> to vector<8x256xf32>
    %17 = arith.mulf %13, %16 : vector<8x256xf32>
    %c1_i32 = arith.constant 1 : i32
    %18 = tpu.dynamic_rotate %1 by %c1_i32 dim 1 : vector<8x256xf32>, i32 -> vector<8x256xf32>
    %c3 = arith.constant 3 : index
    %c0_11 = arith.constant 0 : index
    %c0_12 = arith.constant 0 : index
    %19 = vector.load %arg5[%c3, %c0_11, %c0_12] : memref<9x1x256xf32, #tpu.memory_space<vmem>>, vector<1x1x256xf32>
    %20 = vector.shape_cast %19 : vector<1x1x256xf32> to vector<1x256xf32>
    %21 = vector.broadcast %20 : vector<1x256xf32> to vector<8x256xf32>
    %22 = arith.mulf %18, %21 : vector<8x256xf32>
    %c255_i32 = arith.constant 255 : i32
    %23 = tpu.dynamic_rotate %1 by %c255_i32 dim 1 : vector<8x256xf32>, i32 -> vector<8x256xf32>
    %c5 = arith.constant 5 : index
    %c0_13 = arith.constant 0 : index
    %c0_14 = arith.constant 0 : index
    %24 = vector.load %arg5[%c5, %c0_13, %c0_14] : memref<9x1x256xf32, #tpu.memory_space<vmem>>, vector<1x1x256xf32>
    %25 = vector.shape_cast %24 : vector<1x1x256xf32> to vector<1x256xf32>
    %26 = vector.broadcast %25 : vector<1x256xf32> to vector<8x256xf32>
    %27 = arith.mulf %23, %26 : vector<8x256xf32>
    %c241_i32 = arith.constant 241 : i32
    %28 = tpu.dynamic_rotate %1 by %c241_i32 dim 1 : vector<8x256xf32>, i32 -> vector<8x256xf32>
    %c6 = arith.constant 6 : index
    %c0_15 = arith.constant 0 : index
    %c0_16 = arith.constant 0 : index
    %29 = vector.load %arg5[%c6, %c0_15, %c0_16] : memref<9x1x256xf32, #tpu.memory_space<vmem>>, vector<1x1x256xf32>
    %30 = vector.shape_cast %29 : vector<1x1x256xf32> to vector<1x256xf32>
    %31 = vector.broadcast %30 : vector<1x256xf32> to vector<8x256xf32>
    %32 = arith.mulf %28, %31 : vector<8x256xf32>
    %c240_i32 = arith.constant 240 : i32
    %33 = tpu.dynamic_rotate %1 by %c240_i32 dim 1 : vector<8x256xf32>, i32 -> vector<8x256xf32>
    %c7 = arith.constant 7 : index
    %c0_17 = arith.constant 0 : index
    %c0_18 = arith.constant 0 : index
    %34 = vector.load %arg5[%c7, %c0_17, %c0_18] : memref<9x1x256xf32, #tpu.memory_space<vmem>>, vector<1x1x256xf32>
    %35 = vector.shape_cast %34 : vector<1x1x256xf32> to vector<1x256xf32>
    %36 = vector.broadcast %35 : vector<1x256xf32> to vector<8x256xf32>
    %37 = arith.mulf %33, %36 : vector<8x256xf32>
    %c239_i32 = arith.constant 239 : i32
    %38 = tpu.dynamic_rotate %1 by %c239_i32 dim 1 : vector<8x256xf32>, i32 -> vector<8x256xf32>
    %c8 = arith.constant 8 : index
    %c0_19 = arith.constant 0 : index
    %c0_20 = arith.constant 0 : index
    %39 = vector.load %arg5[%c8, %c0_19, %c0_20] : memref<9x1x256xf32, #tpu.memory_space<vmem>>, vector<1x1x256xf32>
    %40 = vector.shape_cast %39 : vector<1x1x256xf32> to vector<1x256xf32>
    %41 = vector.broadcast %40 : vector<1x256xf32> to vector<8x256xf32>
    %42 = arith.mulf %38, %41 : vector<8x256xf32>
    %43 = tpu.concatenate %7, %12, %17, %22, %1, %27, %32, %37, %42 in 0 : vector<8x256xf32>, vector<8x256xf32>, vector<8x256xf32>, vector<8x256xf32>, vector<8x256xf32>, vector<8x256xf32>, vector<8x256xf32>, vector<8x256xf32>, vector<8x256xf32> -> vector<72x256xf32>
    %cst = arith.constant dense<0.000000e+00> : vector<8x256xf32>
    %44 = tpu.matmul %2, %43, %cst {dimension_numbers = #tpu.dot_dimension_numbers<[1], [0], [0], [1], [0, 0, 1, 1], [], []>} : vector<8x72xf32>, vector<72x256xf32>, vector<8x256xf32> -> vector<8x256xf32>
    %c0_21 = arith.constant 0 : index
    %c0_22 = arith.constant 0 : index
    %c0_23 = arith.constant 0 : index
    %45 = vector.load %arg4[%c0_21, %c0_22, %c0_23] : memref<2x8x1xf32, #tpu.memory_space<vmem>>, vector<1x8x1xf32>
    %46 = vector.shape_cast %45 : vector<1x8x1xf32> to vector<8x1xf32>
    %47 = vector.broadcast %46 : vector<8x1xf32> to vector<8x256xf32>
    %48 = arith.addf %44, %47 : vector<8x256xf32>
    %c0_24 = arith.constant 0 : index
    %c0_25 = arith.constant 0 : index
    %49 = vector.load %arg3[%c0_24, %c0_25] : memref<8x72xf32, #tpu.memory_space<vmem>>, vector<8x72xf32>
    %c17_i32_26 = arith.constant 17 : i32
    %50 = tpu.dynamic_rotate %48 by %c17_i32_26 dim 1 : vector<8x256xf32>, i32 -> vector<8x256xf32>
    %c0_27 = arith.constant 0 : index
    %c0_28 = arith.constant 0 : index
    %c0_29 = arith.constant 0 : index
    %51 = vector.load %arg5[%c0_27, %c0_28, %c0_29] : memref<9x1x256xf32, #tpu.memory_space<vmem>>, vector<1x1x256xf32>
    %52 = vector.shape_cast %51 : vector<1x1x256xf32> to vector<1x256xf32>
    %53 = vector.broadcast %52 : vector<1x256xf32> to vector<8x256xf32>
    %54 = arith.mulf %50, %53 : vector<8x256xf32>
    %c16_i32_30 = arith.constant 16 : i32
    %55 = tpu.dynamic_rotate %48 by %c16_i32_30 dim 1 : vector<8x256xf32>, i32 -> vector<8x256xf32>
    %c1_31 = arith.constant 1 : index
    %c0_32 = arith.constant 0 : index
    %c0_33 = arith.constant 0 : index
    %56 = vector.load %arg5[%c1_31, %c0_32, %c0_33] : memref<9x1x256xf32, #tpu.memory_space<vmem>>, vector<1x1x256xf32>
    %57 = vector.shape_cast %56 : vector<1x1x256xf32> to vector<1x256xf32>
    %58 = vector.broadcast %57 : vector<1x256xf32> to vector<8x256xf32>
    %59 = arith.mulf %55, %58 : vector<8x256xf32>
    %c15_i32_34 = arith.constant 15 : i32
    %60 = tpu.dynamic_rotate %48 by %c15_i32_34 dim 1 : vector<8x256xf32>, i32 -> vector<8x256xf32>
    %c2_35 = arith.constant 2 : index
    %c0_36 = arith.constant 0 : index
    %c0_37 = arith.constant 0 : index
    %61 = vector.load %arg5[%c2_35, %c0_36, %c0_37] : memref<9x1x256xf32, #tpu.memory_space<vmem>>, vector<1x1x256xf32>
    %62 = vector.shape_cast %61 : vector<1x1x256xf32> to vector<1x256xf32>
    %63 = vector.broadcast %62 : vector<1x256xf32> to vector<8x256xf32>
    %64 = arith.mulf %60, %63 : vector<8x256xf32>
    %c1_i32_38 = arith.constant 1 : i32
    %65 = tpu.dynamic_rotate %48 by %c1_i32_38 dim 1 : vector<8x256xf32>, i32 -> vector<8x256xf32>
    %c3_39 = arith.constant 3 : index
    %c0_40 = arith.constant 0 : index
    %c0_41 = arith.constant 0 : index
    %66 = vector.load %arg5[%c3_39, %c0_40, %c0_41] : memref<9x1x256xf32, #tpu.memory_space<vmem>>, vector<1x1x256xf32>
    %67 = vector.shape_cast %66 : vector<1x1x256xf32> to vector<1x256xf32>
    %68 = vector.broadcast %67 : vector<1x256xf32> to vector<8x256xf32>
    %69 = arith.mulf %65, %68 : vector<8x256xf32>
    %c255_i32_42 = arith.constant 255 : i32
    %70 = tpu.dynamic_rotate %48 by %c255_i32_42 dim 1 : vector<8x256xf32>, i32 -> vector<8x256xf32>
    %c5_43 = arith.constant 5 : index
    %c0_44 = arith.constant 0 : index
    %c0_45 = arith.constant 0 : index
    %71 = vector.load %arg5[%c5_43, %c0_44, %c0_45] : memref<9x1x256xf32, #tpu.memory_space<vmem>>, vector<1x1x256xf32>
    %72 = vector.shape_cast %71 : vector<1x1x256xf32> to vector<1x256xf32>
    %73 = vector.broadcast %72 : vector<1x256xf32> to vector<8x256xf32>
    %74 = arith.mulf %70, %73 : vector<8x256xf32>
    %c241_i32_46 = arith.constant 241 : i32
    %75 = tpu.dynamic_rotate %48 by %c241_i32_46 dim 1 : vector<8x256xf32>, i32 -> vector<8x256xf32>
    %c6_47 = arith.constant 6 : index
    %c0_48 = arith.constant 0 : index
    %c0_49 = arith.constant 0 : index
    %76 = vector.load %arg5[%c6_47, %c0_48, %c0_49] : memref<9x1x256xf32, #tpu.memory_space<vmem>>, vector<1x1x256xf32>
    %77 = vector.shape_cast %76 : vector<1x1x256xf32> to vector<1x256xf32>
    %78 = vector.broadcast %77 : vector<1x256xf32> to vector<8x256xf32>
    %79 = arith.mulf %75, %78 : vector<8x256xf32>
    %c240_i32_50 = arith.constant 240 : i32
    %80 = tpu.dynamic_rotate %48 by %c240_i32_50 dim 1 : vector<8x256xf32>, i32 -> vector<8x256xf32>
    %c7_51 = arith.constant 7 : index
    %c0_52 = arith.constant 0 : index
    %c0_53 = arith.constant 0 : index
    %81 = vector.load %arg5[%c7_51, %c0_52, %c0_53] : memref<9x1x256xf32, #tpu.memory_space<vmem>>, vector<1x1x256xf32>
    %82 = vector.shape_cast %81 : vector<1x1x256xf32> to vector<1x256xf32>
    %83 = vector.broadcast %82 : vector<1x256xf32> to vector<8x256xf32>
    %84 = arith.mulf %80, %83 : vector<8x256xf32>
    %c239_i32_54 = arith.constant 239 : i32
    %85 = tpu.dynamic_rotate %48 by %c239_i32_54 dim 1 : vector<8x256xf32>, i32 -> vector<8x256xf32>
    %c8_55 = arith.constant 8 : index
    %c0_56 = arith.constant 0 : index
    %c0_57 = arith.constant 0 : index
    %86 = vector.load %arg5[%c8_55, %c0_56, %c0_57] : memref<9x1x256xf32, #tpu.memory_space<vmem>>, vector<1x1x256xf32>
    %87 = vector.shape_cast %86 : vector<1x1x256xf32> to vector<1x256xf32>
    %88 = vector.broadcast %87 : vector<1x256xf32> to vector<8x256xf32>
    %89 = arith.mulf %85, %88 : vector<8x256xf32>
    %90 = tpu.concatenate %54, %59, %64, %69, %48, %74, %79, %84, %89 in 0 : vector<8x256xf32>, vector<8x256xf32>, vector<8x256xf32>, vector<8x256xf32>, vector<8x256xf32>, vector<8x256xf32>, vector<8x256xf32>, vector<8x256xf32>, vector<8x256xf32> -> vector<72x256xf32>
    %cst_58 = arith.constant dense<0.000000e+00> : vector<8x256xf32>
    %91 = tpu.matmul %49, %90, %cst_58 {dimension_numbers = #tpu.dot_dimension_numbers<[1], [0], [0], [1], [0, 0, 1, 1], [], []>} : vector<8x72xf32>, vector<72x256xf32>, vector<8x256xf32> -> vector<8x256xf32>
    %c1_59 = arith.constant 1 : index
    %c0_60 = arith.constant 0 : index
    %c0_61 = arith.constant 0 : index
    %92 = vector.load %arg4[%c1_59, %c0_60, %c0_61] : memref<2x8x1xf32, #tpu.memory_space<vmem>>, vector<1x8x1xf32>
    %93 = vector.shape_cast %92 : vector<1x8x1xf32> to vector<8x1xf32>
    %94 = vector.broadcast %93 : vector<8x1xf32> to vector<8x256xf32>
    %95 = arith.addf %91, %94 : vector<8x256xf32>
    %cst_62 = arith.constant 0.000000e+00 : f32
    %96 = vector.broadcast %cst_62 : f32 to vector<8x256xf32>
    %97 = arith.maximumf %95, %96 : vector<8x256xf32>
    %c0_63 = arith.constant 0 : index
    %c0_64 = arith.constant 0 : index
    %c0_65 = arith.constant 0 : index
    %98 = vector.load %arg6[%c0_63, %c0_64, %c0_65] : memref<1x8x256xf32, #tpu.memory_space<vmem>>, vector<1x8x256xf32>
    %99 = vector.shape_cast %98 : vector<1x8x256xf32> to vector<8x256xf32>
    %100 = vector.shape_cast %97 : vector<8x256xf32> to vector<1x8x256xf32>
    tpu.vector_store %arg6[%c0_63, %c0_64, %c0_65], %100 {strides = array<i32>} : memref<1x8x256xf32, #tpu.memory_space<vmem>>, vector<1x8x256xf32>,
    return
  }
  func.func @transform_0(%arg0: i32) -> (i32, i32, i32) {
    %c0_i32 = arith.constant 0 : i32
    %c0_i32_0 = arith.constant 0 : i32
    %c0_i32_1 = arith.constant 0 : i32
    return %arg0, %c0_i32, %c0_i32_0 : i32, i32, i32
  }
  func.func @transform_1(%arg0: i32) -> (i32, i32) {
    %c0_i32 = arith.constant 0 : i32
    %c0_i32_0 = arith.constant 0 : i32
    %c0_i32_1 = arith.constant 0 : i32
    return %c0_i32, %c0_i32_0 : i32, i32
  }
  func.func @transform_2(%arg0: i32) -> (i32, i32) {
    %c0_i32 = arith.constant 0 : i32
    %c0_i32_0 = arith.constant 0 : i32
    %c0_i32_1 = arith.constant 0 : i32
    return %c0_i32, %c0_i32_0 : i32, i32
  }
  func.func @transform_3(%arg0: i32) -> (i32, i32, i32) {
    %c0_i32 = arith.constant 0 : i32
    %c0_i32_0 = arith.constant 0 : i32
    %c0_i32_1 = arith.constant 0 : i32
    %c0_i32_2 = arith.constant 0 : i32
    return %c0_i32, %c0_i32_0, %c0_i32_1 : i32, i32, i32
  }
  func.func @transform_4(%arg0: i32) -> (i32, i32, i32) {
    %c0_i32 = arith.constant 0 : i32
    %c0_i32_0 = arith.constant 0 : i32
    %c0_i32_1 = arith.constant 0 : i32
    %c0_i32_2 = arith.constant 0 : i32
    return %c0_i32, %c0_i32_0, %c0_i32_1 : i32, i32, i32
  }
  func.func @transform_5(%arg0: i32) -> (i32, i32, i32) {
    %c0_i32 = arith.constant 0 : i32
    %c0_i32_0 = arith.constant 0 : i32
    %c0_i32_1 = arith.constant 0 : i32
    return %arg0, %c0_i32, %c0_i32_0 : i32, i32, i32
  }
}

</mosaic_0001>

<llo_original>
// kernel: tile.13
$region0: #{tile.13}
  #allocation0 [shape = 's32[1]{0}', space=sflag, size = 0x4, scoped, tag = 'scoped memory for tile.13']
  %s0 = inlined_call_operand.vmem [shape: f32[4], index: 0, kind: input, shape index: {}]
  %s1 = inlined_call_operand.vmem [shape: f32[2,4], index: 1, kind: output, shape index: {}]
  // Predicated region
  $region2: #{tile.13} parent=0 // pred_check
    _
  $region3: #{tile.13} parent=0 // pred_check_branch
    %3 = sbr.rel (0) target = $region5
  $region4: #{tile.13} parent=0 // pred_region
    _
  $region5: #{tile.13} parent=0 // pred_fallthru
    _
  %v4 = vld [vmem:[%s0] ss:$0 sm:$0xff]
  %5 = vst [vmem:[%s1] sm:$0x3] %v4

// kernel: tile.18
$region0: #{tile.18}
  %s0 = inlined_call_operand.vmem [shape: f32[2,4], index: 0, kind: input, shape index: {}]
  %s1 = inlined_call_operand.vmem [shape: f32[1,8], index: 1, kind: output, shape index: {}]
  $region1: #{tile.18} parent=0
    #allocation0 [shape = 'u8[4096]{0}', space=vmem, size = 0x1000, scoped, tag = 'scoped mem for output reshape']
    #allocation1 [shape = 'u8[4096]{0}', space=vmem, size = 0x1000, scoped, tag = 'scoped mem for input reshape']
    %s3 = ssub.s32 4, 1
    %v4 = vld [vmem:[%s0] sm:%s3]
    %5 = vst [vmem:[#allocation1] sm:%s3] %v4
    %v6 = vld [vmem:[#allocation1] sm:$0x1]
    %vm7 = vcmask 31744
    %8 = vst.msk [vmem:[#allocation0] sm:$0x1] %vm7, %v6
    %s9 = scalar_lea.vmem [#allocation1], 1
    %v10 = vld [vmem:[%s9] sm:$0x1]
    %11 = vrot.lane.b32.xlu0 %v10, 4
    %v12 = vpop.permute.xlu0 %11
    %vm13 = vcmask 64544
    %14 = vst.msk [vmem:[#allocation0] sm:$0x1] %vm13, %v12
    %s16 = ssub.s32 2, 1
    %v17 = vld [vmem:[#allocation0] sm:%s16]
    %s19 = ssub.s32 2, 1
    %20 = vst [vmem:[%s1] sm:%s19] %v17

// kernel: type1_forward.1
$region0: #{type1_forward.1}
  #allocation0 [shape = 'u32[]', space=smem, size = 0x4, offset = 0x4, fixed_abs, tag = 'smem constant byte address 0x4 - core index']
  #allocation1 [shape = 'u32[72,128]{1,0:T(1,128)}', space=vmem, size = 0x9000, scoped, tag = 'internal scratch']
  %s0 = inlined_call_operand.vmem [shape: f32[1,8,256], index: 0, kind: input, shape index: {}]
  %s1 = inlined_call_operand.vmem [shape: f32[8,72], index: 1, kind: input, shape index: {}]
  %s2 = inlined_call_operand.vmem [shape: f32[8,72], index: 2, kind: input, shape index: {}]
  %s3 = inlined_call_operand.vmem [shape: f32[2,8,1], index: 3, kind: input, shape index: {}]
  %s4 = inlined_call_operand.vmem [shape: f32[9,1,256], index: 4, kind: input, shape index: {}]
  %s5 = inlined_call_operand.vmem [shape: f32[1,8,256], index: 5, kind: output, shape index: {}]
  %s6 = sld [smem:[#allocation0]]
  $region30: #{type1_forward.1} parent=0
    _
  %s8 = ssub.s32 1, %s6
  %s9 = scalar_select 0, %s8, %s6
  // Predicated region
  $region2: #{type1_forward.1} parent=0 // pred_check
    _
  $region3: #{type1_forward.1} parent=0 // pred_check_branch
    %11 = sbr.rel (0) target = $region5
  $region4: #{type1_forward.1} parent=0 // pred_region
    _
  $region5: #{type1_forward.1} parent=0 // pred_fallthru
    _
  // Predicated region
  $region6: #{type1_forward.1} parent=0 // pred_check
    _
  $region7: #{type1_forward.1} parent=0 // pred_check_branch
    %13 = sbr.rel (0) target = $region9
  $region8: #{type1_forward.1} parent=0 // pred_region
    _
  $region9: #{type1_forward.1} parent=0 // pred_fallthru
    _
  // Predicated region
  $region10: #{type1_forward.1} parent=0 // pred_check
    _
  $region11: #{type1_forward.1} parent=0 // pred_check_branch
    %15 = sbr.rel (0) target = $region13
  $region12: #{type1_forward.1} parent=0 // pred_region
    _
  $region13: #{type1_forward.1} parent=0 // pred_fallthru
    _
  // Predicated region
  $region14: #{type1_forward.1} parent=0 // pred_check
    _
  $region15: #{type1_forward.1} parent=0 // pred_check_branch
    %17 = sbr.rel (0) target = $region17
  $region16: #{type1_forward.1} parent=0 // pred_region
    _
  $region17: #{type1_forward.1} parent=0 // pred_fallthru
    _
  // Predicated region
  $region18: #{type1_forward.1} parent=0 // pred_check
    _
  $region19: #{type1_forward.1} parent=0 // pred_check_branch
    %19 = sbr.rel (0) target = $region21
  $region20: #{type1_forward.1} parent=0 // pred_region
    _
  $region21: #{type1_forward.1} parent=0 // pred_fallthru
    _
  %v20 = vld [vmem:[%s0] sm:$0xff]
  %v21 = vld [vmem:[%s0 + $0x8] sm:$0xff]
  %v22 = vld [vmem:[%s1] sm:$0xff]
  %23 = vrot.lane.b32.xlu0 %v20, 17
  %v24 = vpop.permute.xlu0 %23
  %25 = vrot.lane.b32.xlu0 %v21, 17
  %v26 = vpop.permute.xlu0 %25
  %v27 = vlaneseq
  %v28 = vand.u32 %v27, 127
  %vm29 = vcmp.lt.s32.totalorder %v28, 17
  %v30 = vsel %vm29, %v24, %v26
  %v31 = vsel %vm29, %v26, %v24
  %v32 = vld [vmem:[%s4] sm:$0x3]
  %v34 = vperm.slane %v32, 0
  %v35 = vperm.slane %v32, 1
  %v38 = vmul.f32 %v31, %v34
  %v39 = vmul.f32 %v30, %v35
  %40 = vrot.lane.b32.xlu0 %v20, 16
  %v41 = vpop.permute.xlu0 %40
  %42 = vrot.lane.b32.xlu0 %v21, 16
  %v43 = vpop.permute.xlu0 %42
  %vm44 = vcmp.lt.s32.totalorder %v28, 16
  %v45 = vsel %vm44, %v41, %v43
  %v46 = vsel %vm44, %v43, %v41
  %s47 = scalar_lea.vmem %s4, 2
  %v48 = vld [vmem:[%s47] sm:$0x3]
  %v50 = vperm.slane %v48, 0
  %v51 = vperm.slane %v48, 1
  %v54 = vmul.f32 %v46, %v50
  %v55 = vmul.f32 %v45, %v51
  %56 = vrot.lane.b32.xlu0 %v20, 15
  %v57 = vpop.permute.xlu0 %56
  %58 = vrot.lane.b32.xlu0 %v21, 15
  %v59 = vpop.permute.xlu0 %58
  %vm60 = vcmp.lt.s32.totalorder %v28, 15
  %v61 = vsel %vm60, %v57, %v59
  %v62 = vsel %vm60, %v59, %v57
  %s63 = scalar_lea.vmem %s4, 4
  %v64 = vld [vmem:[%s63] sm:$0x3]
  %v66 = vperm.slane %v64, 0
  %v67 = vperm.slane %v64, 1
  %v70 = vmul.f32 %v62, %v66
  %v71 = vmul.f32 %v61, %v67
  %72 = vrot.lane.b32.xlu0 %v20, 1
  %v73 = vpop.permute.xlu0 %72
  %74 = vrot.lane.b32.xlu0 %v21, 1
  %v75 = vpop.permute.xlu0 %74
  %vm76 = vcmp.lt.s32.totalorder %v28, 1
  %v77 = vsel %vm76, %v73, %v75
  %v78 = vsel %vm76, %v75, %v73
  %s79 = scalar_lea.vmem %s4, 6
  %v80 = vld [vmem:[%s79] sm:$0x3]
  %v82 = vperm.slane %v80, 0
  %v83 = vperm.slane %v80, 1
  %v86 = vmul.f32 %v78, %v82
  %v87 = vmul.f32 %v77, %v83
  %88 = vrot.lane.b32.xlu0 %v20, 127
  %v89 = vpop.permute.xlu0 %88
  %90 = vrot.lane.b32.xlu0 %v21, 127
  %v91 = vpop.permute.xlu0 %90
  %vm92 = vcmp.lt.s32.totalorder %v28, 127
  %v93 = vsel %vm92, %v89, %v91
  %v94 = vsel %vm92, %v91, %v89
  %s95 = scalar_lea.vmem %s4, 10
  %v96 = vld [vmem:[%s95] sm:$0x3]
  %v98 = vperm.slane %v96, 0
  %v99 = vperm.slane %v96, 1
  %v102 = vmul.f32 %v93, %v98
  %v103 = vmul.f32 %v94, %v99
  %104 = vrot.lane.b32.xlu0 %v20, 113
  %v105 = vpop.permute.xlu0 %104
  %106 = vrot.lane.b32.xlu0 %v21, 113
  %v107 = vpop.permute.xlu0 %106
  %vm108 = vcmp.lt.s32.totalorder %v28, 113
  %v109 = vsel %vm108, %v105, %v107
  %v110 = vsel %vm108, %v107, %v105
  %s111 = scalar_lea.vmem %s4, 12
  %v112 = vld [vmem:[%s111] sm:$0x3]
  %v114 = vperm.slane %v112, 0
  %v115 = vperm.slane %v112, 1
  %v118 = vmul.f32 %v109, %v114
  %v119 = vmul.f32 %v110, %v115
  %120 = vrot.lane.b32.xlu0 %v20, 112
  %v121 = vpop.permute.xlu0 %120
  %122 = vrot.lane.b32.xlu0 %v21, 112
  %v123 = vpop.permute.xlu0 %122
  %vm124 = vcmp.lt.s32.totalorder %v28, 112
  %v125 = vsel %vm124, %v121, %v123
  %v126 = vsel %vm124, %v123, %v121
  %s127 = scalar_lea.vmem %s4, 14
  %v128 = vld [vmem:[%s127] sm:$0x3]
  %v130 = vperm.slane %v128, 0
  %v131 = vperm.slane %v128, 1
  %v134 = vmul.f32 %v125, %v130
  %v135 = vmul.f32 %v126, %v131
  %136 = vrot.lane.b32.xlu0 %v20, 111
  %v137 = vpop.permute.xlu0 %136
  %138 = vrot.lane.b32.xlu0 %v21, 111
  %v139 = vpop.permute.xlu0 %138
  %vm140 = vcmp.lt.s32.totalorder %v28, 111
  %v141 = vsel %vm140, %v137, %v139
  %v142 = vsel %vm140, %v139, %v137
  %s143 = scalar_lea.vmem %s4, 16
  %v144 = vld [vmem:[%s143] sm:$0x3]
  %v146 = vperm.slane %v144, 0
  %v147 = vperm.slane %v144, 1
  %v150 = vmul.f32 %v141, %v146
  %v151 = vmul.f32 %v142, %v147
  %v152 = vld [vmem:[%s3] sm:$0xff]
  %154 = vset.pattern.permute.xlu0 0
  %155 = vperm.xlu0 %154, %v152
  %v156 = vpop.permute.xlu0 %155
  %vm158 = vcmask 588800
  %v160 = vsel %vm158, %v22, 0
  %162 = vmatpush.msra.mxu0 0.0
  %163 = vmatpush.msra.mxu0 0.0
  %164 = vmatpush.msra.mxu0 0.0
  %165 = vmatpush.msra.mxu0 0.0
  %166 = vmatpush.msra.mxu0 0.0
  %167 = vmatpush.msra.mxu0 0.0
  %168 = vmatpush.msra.mxu0 0.0
  %169 = vmatpush.msra.mxu0 %v150
  %170 = vmatpush.msra.mxu0 %v134
  %171 = vmatpush.msra.mxu0 %v118
  %172 = vmatpush.msra.mxu0 %v102
  %173 = vmatpush.msra.mxu0 %v20
  %174 = vmatpush.msra.mxu0 %v86
  %175 = vmatpush.msra.mxu0 %v70
  %176 = vmatpush.msra.mxu0 %v54
  %177 = vmatpush.msra.mxu0 %v38
  %178 = vmatmul.f32.gmra.mxu0 %v160
  %v179 = vpop.f32.mrf.mxu0
  %v180 = vadd.f32 %v156, %v179
  %181 = vdwg.mxu0
  %182 = vmatpush.msra.mxu0 0.0
  %183 = vmatpush.msra.mxu0 0.0
  %184 = vmatpush.msra.mxu0 0.0
  %185 = vmatpush.msra.mxu0 0.0
  %186 = vmatpush.msra.mxu0 0.0
  %187 = vmatpush.msra.mxu0 0.0
  %188 = vmatpush.msra.mxu0 0.0
  %189 = vmatpush.msra.mxu0 %v151
  %190 = vmatpush.msra.mxu0 %v135
  %191 = vmatpush.msra.mxu0 %v119
  %192 = vmatpush.msra.mxu0 %v103
  %193 = vmatpush.msra.mxu0 %v21
  %194 = vmatpush.msra.mxu0 %v87
  %195 = vmatpush.msra.mxu0 %v71
  %196 = vmatpush.msra.mxu0 %v55
  %197 = vmatpush.msra.mxu0 %v39
  %198 = vmatmul.f32.gmra.mxu0 %v160
  %v199 = vpop.f32.mrf.mxu0
  %v200 = vadd.f32 %v156, %v199
  %201 = vdwg.mxu0
  %v202 = vld [vmem:[%s2] sm:$0xff]
  %203 = vrot.lane.b32.xlu0 %v180, 17
  %v204 = vpop.permute.xlu0 %203
  %205 = vrot.lane.b32.xlu0 %v200, 17
  %v206 = vpop.permute.xlu0 %205
  %v207 = vsel %vm29, %v204, %v206
  %v208 = vsel %vm29, %v206, %v204
  %v209 = vmul.f32 %v208, %v34
  %v210 = vmul.f32 %v207, %v35
  %211 = vrot.lane.b32.xlu0 %v180, 16
  %v212 = vpop.permute.xlu0 %211
  %213 = vrot.lane.b32.xlu0 %v200, 16
  %v214 = vpop.permute.xlu0 %213
  %v215 = vsel %vm44, %v212, %v214
  %v216 = vsel %vm44, %v214, %v212
  %v217 = vmul.f32 %v216, %v50
  %v218 = vmul.f32 %v215, %v51
  %219 = vrot.lane.b32.xlu0 %v180, 15
  %v220 = vpop.permute.xlu0 %219
  %221 = vrot.lane.b32.xlu0 %v200, 15
  %v222 = vpop.permute.xlu0 %221
  %v223 = vsel %vm60, %v220, %v222
  %v224 = vsel %vm60, %v222, %v220
  %v225 = vmul.f32 %v224, %v66
  %v226 = vmul.f32 %v223, %v67
  %227 = vrot.lane.b32.xlu0 %v180, 1
  %v228 = vpop.permute.xlu0 %227
  %229 = vrot.lane.b32.xlu0 %v200, 1
  %v230 = vpop.permute.xlu0 %229
  %v231 = vsel %vm76, %v228, %v230
  %v232 = vsel %vm76, %v230, %v228
  %v233 = vmul.f32 %v232, %v82
  %v234 = vmul.f32 %v231, %v83
  %235 = vrot.lane.b32.xlu0 %v180, 127
  %v236 = vpop.permute.xlu0 %235
  %237 = vrot.lane.b32.xlu0 %v200, 127
  %v238 = vpop.permute.xlu0 %237
  %v239 = vsel %vm92, %v236, %v238
  %v240 = vsel %vm92, %v238, %v236
  %v241 = vmul.f32 %v239, %v98
  %v242 = vmul.f32 %v240, %v99
  %243 = vrot.lane.b32.xlu0 %v180, 113
  %v244 = vpop.permute.xlu0 %243
  %245 = vrot.lane.b32.xlu0 %v200, 113
  %v246 = vpop.permute.xlu0 %245
  %v247 = vsel %vm108, %v244, %v246
  %v248 = vsel %vm108, %v246, %v244
  %v249 = vmul.f32 %v247, %v114
  %v250 = vmul.f32 %v248, %v115
  %251 = vrot.lane.b32.xlu0 %v180, 112
  %v252 = vpop.permute.xlu0 %251
  %253 = vrot.lane.b32.xlu0 %v200, 112
  %v254 = vpop.permute.xlu0 %253
  %v255 = vsel %vm124, %v252, %v254
  %v256 = vsel %vm124, %v254, %v252
  %v257 = vmul.f32 %v255, %v130
  %v258 = vmul.f32 %v256, %v131
  %259 = vrot.lane.b32.xlu0 %v180, 111
  %v260 = vpop.permute.xlu0 %259
  %261 = vrot.lane.b32.xlu0 %v200, 111
  %v262 = vpop.permute.xlu0 %261
  %v263 = vsel %vm140, %v260, %v262
  %v264 = vsel %vm140, %v262, %v260
  %v265 = vmul.f32 %v263, %v146
  %v266 = vmul.f32 %v264, %v147
  %s267 = scalar_lea.vmem %s3, 8
  %v268 = vld [vmem:[%s267] sm:$0xff]
  %270 = vset.pattern.permute.xlu0 0
  %271 = vperm.xlu0 %270, %v268
  %v272 = vpop.permute.xlu0 %271
  %v275 = vsel %vm158, %v202, 0
  %277 = vmatpush.msra.mxu0 0.0
  %278 = vmatpush.msra.mxu0 0.0
  %279 = vmatpush.msra.mxu0 0.0
  %280 = vmatpush.msra.mxu0 0.0
  %281 = vmatpush.msra.mxu0 0.0
  %282 = vmatpush.msra.mxu0 0.0
  %283 = vmatpush.msra.mxu0 0.0
  %284 = vmatpush.msra.mxu0 %v265
  %285 = vmatpush.msra.mxu0 %v257
  %286 = vmatpush.msra.mxu0 %v249
  %287 = vmatpush.msra.mxu0 %v241
  %288 = vmatpush.msra.mxu0 %v180
  %289 = vmatpush.msra.mxu0 %v233
  %290 = vmatpush.msra.mxu0 %v225
  %291 = vmatpush.msra.mxu0 %v217
  %292 = vmatpush.msra.mxu0 %v209
  %293 = vmatmul.f32.gmra.mxu0 %v275
  %v294 = vpop.f32.mrf.mxu0
  %v295 = vadd.f32 %v272, %v294
  %296 = vdwg.mxu0
  %297 = vmatpush.msra.mxu0 0.0
  %298 = vmatpush.msra.mxu0 0.0
  %299 = vmatpush.msra.mxu0 0.0
  %300 = vmatpush.msra.mxu0 0.0
  %301 = vmatpush.msra.mxu0 0.0
  %302 = vmatpush.msra.mxu0 0.0
  %303 = vmatpush.msra.mxu0 0.0
  %304 = vmatpush.msra.mxu0 %v266
  %305 = vmatpush.msra.mxu0 %v258
  %306 = vmatpush.msra.mxu0 %v250
  %307 = vmatpush.msra.mxu0 %v242
  %308 = vmatpush.msra.mxu0 %v200
  %309 = vmatpush.msra.mxu0 %v234
  %310 = vmatpush.msra.mxu0 %v226
  %311 = vmatpush.msra.mxu0 %v218
  %312 = vmatpush.msra.mxu0 %v210
  %313 = vmatmul.f32.gmra.mxu0 %v275
  %v314 = vpop.f32.mrf.mxu0
  %v315 = vadd.f32 %v272, %v314
  %316 = vdwg.mxu0
  %v317 = vmax.f32 %v295, 0.0
  %v318 = vmax.f32 %v315, 0.0
  %319 = vst [vmem:[%s5] sm:$0xff] %v317
  %320 = vst [vmem:[%s5 + $0x8] sm:$0xff] %v318
  // Predicated region
  $region22: #{type1_forward.1} parent=0 // pred_check
    _
  $region23: #{type1_forward.1} parent=0 // pred_check_branch
    %322 = sbr.rel (0) target = $region25
  $region24: #{type1_forward.1} parent=0 // pred_region
    _
  $region25: #{type1_forward.1} parent=0 // pred_fallthru
    _
  // Predicated region
  $region26: #{type1_forward.1} parent=0 // pred_check
    _
  $region27: #{type1_forward.1} parent=0 // pred_check_branch
    %324 = sbr.rel (0) target = $region29
  $region28: #{type1_forward.1} parent=0 // pred_region
    _
  $region29: #{type1_forward.1} parent=0 // pred_fallthru
    _

</llo_original>
